<compile_context>
chip_gen: v6e
topology: v6e:2x2x1
jax: 0.10.0
libtpu: 0.0.40
codegen_flags: <defaults>
</compile_context>

<pallas_src>
import functools
import math

import jax
import jax.numpy as jnp
from jax.experimental import pallas as pl
from jax.experimental.pallas import tpu as pltpu


def _round_up(x, m):
    return ((x + m - 1) // m) * m


def _cdiv(a, b):
    return -(-a // b)


def _tpu_generation():
    """Heuristic (compute_dtype, tensorcores_per_chip) from the device kind.

    v5e has no bf16 VPU/EUP -> keep f32 there; v6e/v7x halve the EUP tanh
    pushes with bf16.  v7x has 2 TensorCores sharing the "parallel" grid axis.
    """
    kind = ""
    try:
        kind = jax.devices()[0].device_kind.lower()
    except Exception:
        pass
    is_v7 = "v7" in kind
    is_v6 = ("v6" in kind) or ("trillium" in kind)
    compute_dtype = jnp.bfloat16 if (is_v6 or is_v7) else jnp.float32
    num_cores = 2 if is_v7 else 1
    return compute_dtype, num_cores


def _choose_tile(M, col_tile, num_cores):
    """Column (lane) tile size: big tiles to amortize ~0.35us/step overhead,
    grid=1 on single-TC chips for small M, even grid on 2-TC chips."""
    cap = max(128, (int(col_tile) // 128) * 128)
    if num_cores <= 1:
        if M <= cap:
            return _round_up(M, 128)
        return cap
    # >= 2 TensorCores share the "parallel" axis: keep the step count even.
    if M <= 128:
        return 128
    tile = cap
    grid = _cdiv(M, tile)
    if grid == 1:
        tile = _round_up(_cdiv(M, 2), 128)
        grid = _cdiv(M, tile)
    if grid % 2 == 1:
        tile = max(128, _round_up(_cdiv(M, grid + 1), 128))
        grid = _cdiv(M, tile)
        while grid % 2 == 1 and tile > 128:
            tile -= 128
            grid = _cdiv(M, tile)
    return tile


def pack_coeff_nn_params(weights, biases):
    """Pack all layer params into one zero-padded f32 array (L, P, P+1):
       hidden layer i : [:out_f, :in_f] = W_i.T , [:out_f, P] = b_i
       final layer    : [:in_f, 0]      = W_L[:,0], [0, P]    = b_L
    so the kernel needs a single resident constant-index BlockSpec input."""
    num_linear = len(weights)
    num_vars = weights[0].shape[0]
    v_pad = _round_up(max(num_vars, 1), 8)
    dims = [v_pad, 8]
    dims += [w.shape[1] for w in weights[:-1]]
    dims += [w.shape[0] for w in weights[1:]]
    p_dim = _round_up(max(dims), 8)

    packed = jnp.zeros((num_linear, p_dim, p_dim + 1), jnp.float32)
    for i, (w, b) in enumerate(zip(weights, biases)):
        w = jnp.asarray(w, jnp.float32)
        b = jnp.asarray(b, jnp.float32).reshape(1, -1)
        if i < num_linear - 1:
            wt = w.T                                       # (out_f, in_f)
            packed = packed.at[i, : wt.shape[0], : wt.shape[1]].set(wt)
            packed = packed.at[i, : wt.shape[0], p_dim].set(b[0])
        else:
            packed = packed.at[i, : w.shape[0], 0].set(w[:, 0])
            packed = packed.at[i, 0, p_dim].set(b[0, 0])
    return packed, (num_linear, num_vars, v_pad, p_dim)


def _mlp_kernel(num_linear, v_pad, p_dim, strip, h_rows_last, compute_dtype,
                x_ref, p_ref, o_ref):
    """Fused feature-major MLP over one column tile, strip-mined over lanes.

    x_ref : (v_pad, tile)                 features on sublanes, points on lanes
    p_ref : (num_linear, p_dim, p_dim+1)  packed [W_t | b] per layer (zero pad)
    o_ref : (1, tile)                     sigmoid output (lane-dense store)
    """
    # Hoist the (tiny) parameter loads/casts out of the strip loop.
    ws, bs = [], []
    for i in range(num_linear - 1):
        wb = p_ref[i]                                      # (p_dim, p_dim+1)
        in_f = v_pad if i == 0 else p_dim
        ws.append(wb[:, :in_f].astype(compute_dtype))      # (p_dim, in_f)
        bs.append(wb[:, p_dim:p_dim + 1])                  # (p_dim, 1) f32
    wb_last = p_ref[num_linear - 1]
    w_last = wb_last[:h_rows_last, 0:1]                    # (h_rows_last, 1) f32
    b_last = wb_last[0:1, p_dim:p_dim + 1]                 # (1, 1) f32

    n_strips = x_ref.shape[-1] // strip

    def body(s, carry):
        c0 = pl.multiple_of(s * strip, strip)              # 128-aligned lane offset
        h = x_ref[:, pl.ds(c0, strip)].astype(compute_dtype)   # (v_pad, strip)
        for i in range(num_linear - 1):
            z = jnp.dot(ws[i], h, preferred_element_type=jnp.float32) + bs[i]
            h = jnp.tanh(z.astype(compute_dtype))          # (p_dim, strip)
        # Final width-1 layer: VPU multiply + sublane (XLU) reduce instead of a
        # 1-row MXU matmul, then a single-row sigmoid.
        hf = h.astype(jnp.float32)
        z = jnp.sum(hf * w_last, axis=0, keepdims=True) + b_last   # (1, strip)
        o_ref[:, pl.ds(c0, strip)] = jax.nn.sigmoid(z).astype(o_ref.dtype)
        return carry

    jax.lax.fori_loop(0, n_strips, body, 0)


def coeff_nn_forward(x, weights, biases, *, col_tile=8192, compute_dtype=None):
    """Coeff_NN forward on x of shape [Nx, Ny, num_vars] -> [Nx, Ny, 1].

    weights: list of (in_features, out_features) arrays
    biases : list of (1, out_features) arrays
    """
    Nx, Ny, num_vars_in = x.shape
    M = Nx * Ny

    packed, (num_linear, num_vars, v_pad, p_dim) = pack_coeff_nn_params(weights, biases)
    assert num_vars == num_vars_in

    default_dtype, num_cores = _tpu_generation()
    if compute_dtype is None:
        compute_dtype = default_dtype

    tile = _choose_tile(M, col_tile, num_cores)
    grid = _cdiv(M, tile)
    M_pad = grid * tile
    strip = math.gcd(tile, 512)

    # Feature-major layout (grid points on the 128-lane axis).  Pad the feature
    # axis to 8 sublanes and the point axis to the tile multiple; under jit the
    # pad + transpose fuse into a single copy.
    # TODO(synk): accept a pre-transposed (v_pad, M) input from the producer to
    # skip this HBM round-trip when the NN is called repeatedly.
    x2 = x.reshape(M, num_vars).astype(jnp.float32)
    x2 = jnp.pad(x2, ((0, M_pad - M), (0, v_pad - num_vars)))
    x_t = x2.T                                             # (v_pad, M_pad)

    h_rows_last = p_dim if num_linear > 1 else v_pad

    kernel = functools.partial(
        _mlp_kernel, num_linear, v_pad, p_dim, strip, h_rows_last, compute_dtype)

    hidden = sum(w.shape[1] for w in weights[:-1])
    cost = pl.CostEstimate(
        flops=int(sum(2 * M * w.shape[0] * w.shape[1] for w in weights)),
        transcendentals=int(M * (hidden + 1)),
        bytes_accessed=int(4 * M * (v_pad + 1) + 4 * packed.size),
    )

    out_t = pl.pallas_call(
        kernel,
        out_shape=jax.ShapeDtypeStruct((1, M_pad), x.dtype),
        grid_spec=pltpu.PrefetchScalarGridSpec(
            num_scalar_prefetch=0,
            grid=(grid,),
            in_specs=[
                pl.BlockSpec((v_pad, tile), lambda i: (0, i)),      # input tile
                pl.BlockSpec(packed.shape, lambda i: (0, 0, 0)),    # resident params
            ],
            out_specs=pl.BlockSpec((1, tile), lambda i: (0, i)),    # lane-dense out
        ),
        compiler_params=pltpu.CompilerParams(
            dimension_semantics=("parallel",),
        ),
        cost_estimate=cost,
    )(x_t, packed)

    return out_t[0, :M].reshape(Nx, Ny, 1)


def _reference_forward(x, weights, biases):
    """Pure-JAX f32 reference of Coeff_NN.forward (row-major)."""
    h = x.astype(jnp.float32)
    n_lin = len(weights)
    for i, (w, b) in enumerate(zip(weights, biases)):
        h = h @ w + b
        if i < n_lin - 1:
            h = jnp.tanh(h)
        else:
            h = jax.nn.sigmoid(h)
    return h


def _init_params(key, num_layers, num_nodes, num_vars):
    """Deterministic init mirroring the layer shapes from Coeff_NN.__init__."""
    weights, biases = [], []
    for i in range(num_layers + 1):
        in_f = num_nodes
        out_f = num_nodes
        if i == 0:
            in_f = num_vars
        if i == num_layers:
            out_f = 1
        key, kw, kb = jax.random.split(key, 3)
        bound = 1.0 / jnp.sqrt(jnp.float32(in_f))   # PyTorch Linear default range
        w = jax.random.uniform(kw, (in_f, out_f), jnp.float32, -bound, bound)
        b = jax.random.uniform(kb, (1, out_f), jnp.float32, -bound, bound)
        weights.append(w)
        biases.append(b)
    return weights, biases


if __name__ == "__main__":
    # Small shapes consistent with the module's forward ([Nx, Ny, num_vars]).
    num_layers = 2
    num_nodes = 32
    num_vars = 4
    Nx, Ny = 16, 16

    key = jax.random.PRNGKey(0)
    key, kx = jax.random.split(key)
    x = jax.random.normal(kx, (Nx, Ny, num_vars), dtype=jnp.float32)
    weights, biases = _init_params(key, num_layers, num_nodes, num_vars)

    ref = _reference_forward(x.reshape(-1, num_vars), weights, biases).reshape(Nx, Ny, 1)

    # 1) Strict structural check with an f32 compute path (all generations).
    fwd_f32 = jax.jit(functools.partial(coeff_nn_forward, compute_dtype=jnp.float32))
    out_f32 = jax.block_until_ready(fwd_f32(x, weights, biases))
    assert out_f32.shape == (Nx, Ny, 1)
    assert jnp.allclose(out_f32, ref, atol=1e-5, rtol=1e-5), "f32 path mismatch"

    # 2) Generation-default path (bf16 hidden math on v6e/v7x, f32 on v5e).
    fwd = jax.jit(coeff_nn_forward)
    out = jax.block_until_ready(fwd(x, weights, biases))
    default_dtype, _ = _tpu_generation()
    tol = 1e-5 if default_dtype == jnp.float32 else 5e-2
    assert out.shape == (Nx, Ny, 1)
    assert jnp.allclose(out, ref, atol=tol, rtol=tol), "default path mismatch"

    print("KERNEL_OK")
</pallas_src>

<mosaic_0001>
module attributes {stable_mosaic.version = 11 : i64} {
  func.func @_mlp_kernel(%arg0: i32, %arg1: memref<8x256xf32, #tpu.memory_space<vmem>>, %arg2: memref<3x32x33xf32, #tpu.memory_space<vmem>>, %arg3: memref<1x256xf32, #tpu.memory_space<vmem>>) attributes {dimension_semantics = [#tpu.dimension_semantics<parallel>], iteration_bounds = array<i64: 1>, scalar_prefetch = 0 : i64, scratch_operands = 0 : i64, tpu.core_type = #tpu.core_type<tc>, window_params = [{transform_indices = @transform_0, window_bounds = array<i64: 8, 256>}, {pipeline_mode = #tpu.pipeline_mode<synchronous>, transform_indices = @transform_1, window_bounds = array<i64: 3, 32, 33>}, {transform_indices = @transform_2, window_bounds = array<i64: 1, 256>}]} {
    %c0 = arith.constant 0 : index
    %c0_0 = arith.constant 0 : index
    %c0_1 = arith.constant 0 : index
    %0 = vector.load %arg2[%c0, %c0_0, %c0_1] : memref<3x32x33xf32, #tpu.memory_space<vmem>>, vector<1x32x33xf32>
    %1 = vector.shape_cast %0 : vector<1x32x33xf32> to vector<32x33xf32>
    %2 = vector.extract_strided_slice %1 {offsets = [0, 0], sizes = [32, 8], strides = [1, 1]} : vector<32x33xf32> to vector<32x8xf32>
    %3 = vector.extract_strided_slice %1 {offsets = [0, 32], sizes = [32, 1], strides = [1, 1]} : vector<32x33xf32> to vector<32x1xf32>
    %c1 = arith.constant 1 : index
    %c0_2 = arith.constant 0 : index
    %c0_3 = arith.constant 0 : index
    %4 = vector.load %arg2[%c1, %c0_2, %c0_3] : memref<3x32x33xf32, #tpu.memory_space<vmem>>, vector<1x32x33xf32>
    %5 = vector.shape_cast %4 : vector<1x32x33xf32> to vector<32x33xf32>
    %6 = vector.extract_strided_slice %5 {offsets = [0, 0], sizes = [32, 32], strides = [1, 1]} : vector<32x33xf32> to vector<32x32xf32>
    %7 = vector.extract_strided_slice %5 {offsets = [0, 32], sizes = [32, 1], strides = [1, 1]} : vector<32x33xf32> to vector<32x1xf32>
    %c2 = arith.constant 2 : index
    %c0_4 = arith.constant 0 : index
    %c0_5 = arith.constant 0 : index
    %8 = vector.load %arg2[%c2, %c0_4, %c0_5] : memref<3x32x33xf32, #tpu.memory_space<vmem>>, vector<1x32x33xf32>
    %9 = vector.shape_cast %8 : vector<1x32x33xf32> to vector<32x33xf32>
    %10 = vector.extract_strided_slice %9 {offsets = [0, 0], sizes = [32, 1], strides = [1, 1]} : vector<32x33xf32> to vector<32x1xf32>
    %11 = vector.extract_strided_slice %9 {offsets = [0, 32], sizes = [1, 1], strides = [1, 1]} : vector<32x33xf32> to vector<1x1xf32>
    %c0_i32 = arith.constant 0 : i32
    %c256_i32 = arith.constant 256 : i32
    %12 = arith.muli %c0_i32, %c256_i32 : i32
    %13 = tpu.assume_multiple %12, 256 : i32
    %c0_6 = arith.constant 0 : index
    %14 = arith.index_cast %13 : i32 to index
    %15 = vector.load %arg1[%c0_6, %14] : memref<8x256xf32, #tpu.memory_space<vmem>>, vector<8x256xf32>
    %cst = arith.constant dense<0.000000e+00> : vector<32x256xf32>
    %16 = tpu.matmul %2, %15, %cst {dimension_numbers = #tpu.dot_dimension_numbers<[1], [0], [0], [1], [0, 0, 1, 1], [], []>} : vector<32x8xf32>, vector<8x256xf32>, vector<32x256xf32> -> vector<32x256xf32>
    %17 = vector.broadcast %3 : vector<32x1xf32> to vector<32x256xf32>
    %18 = arith.addf %16, %17 : vector<32x256xf32>
    %19 = math.tanh %18 : vector<32x256xf32>
    %cst_7 = arith.constant dense<0.000000e+00> : vector<32x256xf32>
    %20 = tpu.matmul %6, %19, %cst_7 {dimension_numbers = #tpu.dot_dimension_numbers<[1], [0], [0], [1], [0, 0, 1, 1], [], []>} : vector<32x32xf32>, vector<32x256xf32>, vector<32x256xf32> -> vector<32x256xf32>
    %21 = vector.broadcast %7 : vector<32x1xf32> to vector<32x256xf32>
    %22 = arith.addf %20, %21 : vector<32x256xf32>
    %23 = math.tanh %22 : vector<32x256xf32>
    %24 = vector.broadcast %10 : vector<32x1xf32> to vector<32x256xf32>
    %25 = arith.mulf %23, %24 : vector<32x256xf32>
    %cst_8 = arith.constant dense<0.000000e+00> : vector<256xf32>
    %26 = vector.multi_reduction <add>, %25, %cst_8 [0] : vector<32x256xf32> to vector<256xf32>
    %27 = vector.shape_cast %26 : vector<256xf32> to vector<1x256xf32>
    %28 = vector.broadcast %11 : vector<1x1xf32> to vector<1x256xf32>
    %29 = arith.addf %27, %28 : vector<1x256xf32>
    %30 = arith.negf %29 : vector<1x256xf32>
    %31 = math.exp %30 : vector<1x256xf32>
    %cst_9 = arith.constant 1.000000e+00 : f32
    %32 = vector.broadcast %cst_9 : f32 to vector<1x256xf32>
    %33 = arith.addf %32, %31 : vector<1x256xf32>
    %34 = arith.divf %32, %33 : vector<1x256xf32>
    %c0_10 = arith.constant 0 : index
    %35 = arith.index_cast %13 : i32 to index
    %36 = vector.load %arg3[%c0_10, %35] : memref<1x256xf32, #tpu.memory_space<vmem>>, vector<1x256xf32>
    tpu.vector_store %arg3[%c0_10, %35], %34 {strides = array<i32>} : memref<1x256xf32, #tpu.memory_space<vmem>>, vector<1x256xf32>,
    %c1_i32 = arith.constant 1 : i32
    return
  }
  func.func @transform_0(%arg0: i32) -> (i32, i32) {
    %c0_i32 = arith.constant 0 : i32
    %c0_i32_0 = arith.constant 0 : i32
    return %c0_i32, %arg0 : i32, i32
  }
  func.func @transform_1(%arg0: i32) -> (i32, i32, i32) {
    %c0_i32 = arith.constant 0 : i32
    %c0_i32_0 = arith.constant 0 : i32
    %c0_i32_1 = arith.constant 0 : i32
    %c0_i32_2 = arith.constant 0 : i32
    return %c0_i32, %c0_i32_0, %c0_i32_1 : i32, i32, i32
  }
  func.func @transform_2(%arg0: i32) -> (i32, i32) {
    %c0_i32 = arith.constant 0 : i32
    %c0_i32_0 = arith.constant 0 : i32
    return %c0_i32, %arg0 : i32, i32
  }
}

</mosaic_0001>

<llo_original>
// kernel: squeeze.9
$region0: #{squeeze.9}
  %s0 = inlined_call_operand.vmem [shape: f32[256], index: 0, kind: input, shape index: {}]
  %s1 = inlined_call_operand.hbm [shape: f32[16,16,1], index: 1, kind: output, shape index: {}]
  $region1: #{squeeze.9} parent=0
    #allocation0 [shape = 'u8[8192]{0}', space=vmem, size = 0x2000, scoped, tag = 'operand span for operand 1']
    #allocation1 [shape = 's32[1]{0}', space=sflag, size = 0x4, scoped, tag = 'scoped memory for squeeze.9']
    #allocation2 [shape = 'u8[4096]{0}', space=vmem, size = 0x1000, scoped, tag = 'scoped mem for input reshape']
    %2 = vsyncpa [#allocation1], 0
    %s4 = sshll.u32 1, 2
    %s5 = ssub.s32 %s4, 1
    %v6 = vld [vmem:[%s0] sm:%s5]
    %7 = vst [vmem:[#allocation2] sm:%s5] %v6
    %v8 = vld [vmem:[#allocation2] sm:$0x3]
    %vm9 = vcmask 130048
    %10 = vst.msk [vmem:[#allocation0] ss:$8 sm:$0x3] %vm9, %v8
    %v11 = vld [vmem:[#allocation2] sm:$0x3]
    %12 = vrot.lane.b32.xlu0 %v11, 112
    %v13 = vpop.permute.xlu0 %12
    %vm14 = vcmask 130048
    %s15 = scalar_lea.vmem [#allocation0], 1
    %16 = vst.msk [vmem:[%s15] ss:$8 sm:$0x3] %vm14, %v13
    %v17 = vld [vmem:[#allocation2] sm:$0x3]
    %18 = vrot.lane.b32.xlu0 %v17, 96
    %v19 = vpop.permute.xlu0 %18
    %vm20 = vcmask 130048
    %s21 = scalar_lea.vmem [#allocation0], 2
    %22 = vst.msk [vmem:[%s21] ss:$8 sm:$0x3] %vm20, %v19
    %v23 = vld [vmem:[#allocation2] sm:$0x3]
    %24 = vrot.lane.b32.xlu0 %v23, 80
    %v25 = vpop.permute.xlu0 %24
    %vm26 = vcmask 130048
    %s27 = scalar_lea.vmem [#allocation0], 3
    %28 = vst.msk [vmem:[%s27] ss:$8 sm:$0x3] %vm26, %v25
    %v29 = vld [vmem:[#allocation2] sm:$0x3]
    %30 = vrot.lane.b32.xlu0 %v29, 64
    %v31 = vpop.permute.xlu0 %30
    %vm32 = vcmask 130048
    %s33 = scalar_lea.vmem [#allocation0], 4
    %34 = vst.msk [vmem:[%s33] ss:$8 sm:$0x3] %vm32, %v31
    %v35 = vld [vmem:[#allocation2] sm:$0x3]
    %36 = vrot.lane.b32.xlu0 %v35, 48
    %v37 = vpop.permute.xlu0 %36
    %vm38 = vcmask 130048
    %s39 = scalar_lea.vmem [#allocation0], 5
    %40 = vst.msk [vmem:[%s39] ss:$8 sm:$0x3] %vm38, %v37
    %v41 = vld [vmem:[#allocation2] sm:$0x3]
    %42 = vrot.lane.b32.xlu0 %v41, 32
    %v43 = vpop.permute.xlu0 %42
    %vm44 = vcmask 130048
    %s45 = scalar_lea.vmem [#allocation0], 6
    %46 = vst.msk [vmem:[%s45] ss:$8 sm:$0x3] %vm44, %v43
    %v47 = vld [vmem:[#allocation2] sm:$0x3]
    %48 = vrot.lane.b32.xlu0 %v47, 16
    %v49 = vpop.permute.xlu0 %48
    %vm50 = vcmask 130048
    %s51 = scalar_lea.vmem [#allocation0], 7
    %52 = vst.msk [vmem:[%s51] ss:$8 sm:$0x3] %vm50, %v49
    %s54 = ssub.s32 256, 256
    %55 = vsyncadd [#allocation1], %s54
    %s57 = sshll.u32 [#allocation0], 4
    %s58 = int_to_ptr.vmem [resolvable:$true] %s57
    %60 = dma.vmem_to_hbm [thread:$0]  %s58, 256, %s1, [#allocation1]
    %61 = dma.done [#allocation1], 256
    %62 = vsyncpa [#allocation1], 1

// kernel: coeff_nn_forward.1
$region0: #{coeff_nn_forward.1}
  #allocation0 [shape = 'u32[]', space=smem, size = 0x4, offset = 0x4, fixed_abs, tag = 'smem constant byte address 0x4 - core index']
  #allocation1 [shape = 'u32[144,128]{1,0:T(1,128)}', space=vmem, size = 0x12000, scoped, tag = 'internal scratch']
  %s0 = inlined_call_operand.vmem [shape: f32[8,256], index: 0, kind: input, shape index: {}]
  %s1 = inlined_call_operand.vmem [shape: f32[3,32,33], index: 1, kind: input, shape index: {}]
  %s2 = inlined_call_operand.vmem [shape: f32[1,256], index: 2, kind: output, shape index: {}]
  %s3 = sld [smem:[#allocation0]]
  $region18: #{coeff_nn_forward.1} parent=0
    _
  %s5 = ssub.s32 1, %s3
  %s6 = scalar_select 0, %s5, %s3
  // Predicated region
  $region2: #{coeff_nn_forward.1} parent=0 // pred_check
    _
  $region3: #{coeff_nn_forward.1} parent=0 // pred_check_branch
    %8 = sbr.rel (0) target = $region5
  $region4: #{coeff_nn_forward.1} parent=0 // pred_region
    _
  $region5: #{coeff_nn_forward.1} parent=0 // pred_fallthru
    _
  // Predicated region
  $region6: #{coeff_nn_forward.1} parent=0 // pred_check
    _
  $region7: #{coeff_nn_forward.1} parent=0 // pred_check_branch
    %10 = sbr.rel (0) target = $region9
  $region8: #{coeff_nn_forward.1} parent=0 // pred_region
    _
  $region9: #{coeff_nn_forward.1} parent=0 // pred_fallthru
    _
  %v11 = vld [vmem:[%s1] sm:$0xff]
  %v12 = vld [vmem:[%s1 + $0x8] sm:$0xff]
  %v13 = vld [vmem:[%s1 + $0x10] sm:$0xff]
  %v14 = vld [vmem:[%s1 + $0x18] sm:$0xff]
  %s15 = scalar_lea.vmem %s1, 32
  %v16 = vld [vmem:[%s15] sm:$0xff]
  %v17 = vld [vmem:[%s15 + $0x8] sm:$0xff]
  %v18 = vld [vmem:[%s15 + $0x10] sm:$0xff]
  %v19 = vld [vmem:[%s15 + $0x18] sm:$0xff]
  %s20 = scalar_lea.vmem %s1, 64
  %v21 = vld [vmem:[%s20] sm:$0xff]
  %v22 = vld [vmem:[%s20 + $0x8] sm:$0xff]
  %v23 = vld [vmem:[%s20 + $0x10] sm:$0xff]
  %v24 = vld [vmem:[%s20 + $0x18] sm:$0xff]
  %v25 = vld [vmem:[%s0] sm:$0xff]
  %v26 = vld [vmem:[%s0 + $0x8] sm:$0xff]
  %28 = vset.pattern.permute.xlu0 32
  %29 = vperm.xlu0 %28, %v11
  %v30 = vpop.permute.xlu0 %29
  %33 = vset.pattern.permute.xlu0 32
  %34 = vperm.xlu0 %33, %v12
  %v35 = vpop.permute.xlu0 %34
  %38 = vset.pattern.permute.xlu0 32
  %39 = vperm.xlu0 %38, %v13
  %v40 = vpop.permute.xlu0 %39
  %43 = vset.pattern.permute.xlu0 32
  %44 = vperm.xlu0 %43, %v14
  %v45 = vpop.permute.xlu0 %44
  %vm47 = vcmask 64512
  %v48 = vsel %vm47, %v11, 0
  %v50 = vsel %vm47, %v12, 0
  %v52 = vsel %vm47, %v13, 0
  %v54 = vsel %vm47, %v14, 0
  %56 = vmatprep.subr.mxu0 0.0
  %57 = vmatpush1.msra.mxu0 0.0
  %58 = vmatprep.subr.mxu0 0.0
  %59 = vmatpush1.msra.mxu0 0.0
  %60 = vmatprep.subr.mxu0 0.0
  %61 = vmatpush1.msra.mxu0 0.0
  %62 = vmatprep.subr.mxu0 0.0
  %63 = vmatpush1.msra.mxu0 0.0
  %64 = vmatprep.subr.mxu0 0.0
  %65 = vmatpush1.msra.mxu0 0.0
  %66 = vmatprep.subr.mxu0 0.0
  %67 = vmatpush1.msra.mxu0 0.0
  %68 = vmatprep.subr.mxu0 0.0
  %69 = vmatpush1.msra.mxu0 0.0
  %70 = vmatprep.subr.mxu0 0.0
  %71 = vmatpush1.msra.mxu0 0.0
  %72 = vmatprep.subr.mxu0 0.0
  %73 = vmatpush1.msra.mxu0 0.0
  %74 = vmatprep.subr.mxu0 0.0
  %75 = vmatpush1.msra.mxu0 0.0
  %76 = vmatprep.subr.mxu0 0.0
  %77 = vmatpush1.msra.mxu0 0.0
  %78 = vmatprep.subr.mxu0 0.0
  %79 = vmatpush1.msra.mxu0 0.0
  %80 = vmatprep.subr.mxu0 0.0
  %81 = vmatpush1.msra.mxu0 0.0
  %82 = vmatprep.subr.mxu0 0.0
  %83 = vmatpush1.msra.mxu0 0.0
  %84 = vmatprep.subr.mxu0 0.0
  %85 = vmatpush1.msra.mxu0 0.0
  %86 = vmatprep.subr.mxu0 %v26
  %87 = vmatpush1.msra.mxu0 %v25
  %88 = vmatprep.subr.mxu0 0.0
  %89 = vmatpush2.msra.mxu0 0.0
  %90 = vmatprep.subr.mxu0 0.0
  %91 = vmatpush2.msra.mxu0 0.0
  %92 = vmatprep.subr.mxu0 0.0
  %93 = vmatpush2.msra.mxu0 0.0
  %94 = vmatprep.subr.mxu0 0.0
  %95 = vmatpush2.msra.mxu0 0.0
  %96 = vmatprep.subr.mxu0 0.0
  %97 = vmatpush2.msra.mxu0 0.0
  %98 = vmatprep.subr.mxu0 0.0
  %99 = vmatpush2.msra.mxu0 0.0
  %100 = vmatprep.subr.mxu0 0.0
  %101 = vmatpush2.msra.mxu0 0.0
  %102 = vmatprep.subr.mxu0 0.0
  %103 = vmatpush2.msra.mxu0 0.0
  %104 = vmatprep.subr.mxu0 0.0
  %105 = vmatpush2.msra.mxu0 0.0
  %106 = vmatprep.subr.mxu0 0.0
  %107 = vmatpush2.msra.mxu0 0.0
  %108 = vmatprep.subr.mxu0 0.0
  %109 = vmatpush2.msra.mxu0 0.0
  %110 = vmatprep.subr.mxu0 0.0
  %111 = vmatpush2.msra.mxu0 0.0
  %112 = vmatprep.subr.mxu0 0.0
  %113 = vmatpush2.msra.mxu0 0.0
  %114 = vmatprep.subr.mxu0 0.0
  %115 = vmatpush2.msra.mxu0 0.0
  %116 = vmatprep.subr.mxu0 0.0
  %117 = vmatpush2.msra.mxu0 0.0
  %118 = vmatprep.subr.mxu0 0.0
  %119 = vmatpush2.msra.mxu0 0.0
  %120 = vmatprep.mubr.f32.mxu0 0.0
  %121 = vmatmul.mubr.f32.gmra.mxu0 %v48
  %v122 = vpop.f32.mrf.mxu0
  %v123 = vadd.f32 %v30, %v122
  %v124 = vpop.f32.mrf.mxu0
  %v125 = vadd.f32 %v30, %v124
  %126 = vmatprep.mubr.f32.mxu0 0.0
  %127 = vmatmul.mubr.f32.gmra.mxu0 %v50
  %v128 = vpop.f32.mrf.mxu0
  %v129 = vadd.f32 %v35, %v128
  %v130 = vpop.f32.mrf.mxu0
  %v131 = vadd.f32 %v35, %v130
  %132 = vmatprep.mubr.f32.mxu0 0.0
  %133 = vmatmul.mubr.f32.gmra.mxu0 %v52
  %v134 = vpop.f32.mrf.mxu0
  %v135 = vadd.f32 %v40, %v134
  %v136 = vpop.f32.mrf.mxu0
  %v137 = vadd.f32 %v40, %v136
  %138 = vmatprep.mubr.f32.mxu0 0.0
  %139 = vmatmul.mubr.f32.gmra.mxu0 %v54
  %v140 = vpop.f32.mrf.mxu0
  %v141 = vadd.f32 %v45, %v140
  %v142 = vpop.f32.mrf.mxu0
  %v143 = vadd.f32 %v45, %v142
  %144 = vdwg.mxu0
  %v145 = vtanh.pop %v123
  %v146 = vtanh.pop %v125
  %v147 = vtanh.pop %v129
  %v148 = vtanh.pop %v131
  %v149 = vtanh.pop %v135
  %v150 = vtanh.pop %v137
  %v151 = vtanh.pop %v141
  %v152 = vtanh.pop %v143
  %154 = vset.pattern.permute.xlu0 32
  %155 = vperm.xlu0 %154, %v16
  %v156 = vpop.permute.xlu0 %155
  %159 = vset.pattern.permute.xlu0 32
  %160 = vperm.xlu0 %159, %v17
  %v161 = vpop.permute.xlu0 %160
  %164 = vset.pattern.permute.xlu0 32
  %165 = vperm.xlu0 %164, %v18
  %v166 = vpop.permute.xlu0 %165
  %169 = vset.pattern.permute.xlu0 32
  %170 = vperm.xlu0 %169, %v19
  %v171 = vpop.permute.xlu0 %170
  %vm173 = vcmask 261120
  %v174 = vsel %vm173, %v16, 0
  %v176 = vsel %vm173, %v17, 0
  %v178 = vsel %vm173, %v18, 0
  %v180 = vsel %vm173, %v19, 0
  %182 = vmatprep.subr.mxu0 0.0
  %183 = vmatpush1.msra.mxu0 0.0
  %184 = vmatprep.subr.mxu0 0.0
  %185 = vmatpush1.msra.mxu0 0.0
  %186 = vmatprep.subr.mxu0 0.0
  %187 = vmatpush1.msra.mxu0 0.0
  %188 = vmatprep.subr.mxu0 0.0
  %189 = vmatpush1.msra.mxu0 0.0
  %190 = vmatprep.subr.mxu0 0.0
  %191 = vmatpush1.msra.mxu0 0.0
  %192 = vmatprep.subr.mxu0 0.0
  %193 = vmatpush1.msra.mxu0 0.0
  %194 = vmatprep.subr.mxu0 0.0
  %195 = vmatpush1.msra.mxu0 0.0
  %196 = vmatprep.subr.mxu0 0.0
  %197 = vmatpush1.msra.mxu0 0.0
  %198 = vmatprep.subr.mxu0 0.0
  %199 = vmatpush1.msra.mxu0 0.0
  %200 = vmatprep.subr.mxu0 0.0
  %201 = vmatpush1.msra.mxu0 0.0
  %202 = vmatprep.subr.mxu0 0.0
  %203 = vmatpush1.msra.mxu0 0.0
  %204 = vmatprep.subr.mxu0 0.0
  %205 = vmatpush1.msra.mxu0 0.0
  %206 = vmatprep.subr.mxu0 %v152
  %207 = vmatpush1.msra.mxu0 %v151
  %208 = vmatprep.subr.mxu0 %v150
  %209 = vmatpush1.msra.mxu0 %v149
  %210 = vmatprep.subr.mxu0 %v148
  %211 = vmatpush1.msra.mxu0 %v147
  %212 = vmatprep.subr.mxu0 %v146
  %213 = vmatpush1.msra.mxu0 %v145
  %214 = vmatprep.subr.mxu0 0.0
  %215 = vmatpush2.msra.mxu0 0.0
  %216 = vmatprep.subr.mxu0 0.0
  %217 = vmatpush2.msra.mxu0 0.0
  %218 = vmatprep.subr.mxu0 0.0
  %219 = vmatpush2.msra.mxu0 0.0
  %220 = vmatprep.subr.mxu0 0.0
  %221 = vmatpush2.msra.mxu0 0.0
  %222 = vmatprep.subr.mxu0 0.0
  %223 = vmatpush2.msra.mxu0 0.0
  %224 = vmatprep.subr.mxu0 0.0
  %225 = vmatpush2.msra.mxu0 0.0
  %226 = vmatprep.subr.mxu0 0.0
  %227 = vmatpush2.msra.mxu0 0.0
  %228 = vmatprep.subr.mxu0 0.0
  %229 = vmatpush2.msra.mxu0 0.0
  %230 = vmatprep.subr.mxu0 0.0
  %231 = vmatpush2.msra.mxu0 0.0
  %232 = vmatprep.subr.mxu0 0.0
  %233 = vmatpush2.msra.mxu0 0.0
  %234 = vmatprep.subr.mxu0 0.0
  %235 = vmatpush2.msra.mxu0 0.0
  %236 = vmatprep.subr.mxu0 0.0
  %237 = vmatpush2.msra.mxu0 0.0
  %238 = vmatprep.subr.mxu0 0.0
  %239 = vmatpush2.msra.mxu0 0.0
  %240 = vmatprep.subr.mxu0 0.0
  %241 = vmatpush2.msra.mxu0 0.0
  %242 = vmatprep.subr.mxu0 0.0
  %243 = vmatpush2.msra.mxu0 0.0
  %244 = vmatprep.subr.mxu0 0.0
  %245 = vmatpush2.msra.mxu0 0.0
  %246 = vmatprep.mubr.f32.mxu0 0.0
  %247 = vmatmul.mubr.f32.gmra.mxu0 %v174
  %v248 = vpop.f32.mrf.mxu0
  %v249 = vadd.f32 %v156, %v248
  %v250 = vpop.f32.mrf.mxu0
  %v251 = vadd.f32 %v156, %v250
  %252 = vmatprep.mubr.f32.mxu0 0.0
  %253 = vmatmul.mubr.f32.gmra.mxu0 %v176
  %v254 = vpop.f32.mrf.mxu0
  %v255 = vadd.f32 %v161, %v254
  %v256 = vpop.f32.mrf.mxu0
  %v257 = vadd.f32 %v161, %v256
  %258 = vmatprep.mubr.f32.mxu0 0.0
  %259 = vmatmul.mubr.f32.gmra.mxu0 %v178
  %v260 = vpop.f32.mrf.mxu0
  %v261 = vadd.f32 %v166, %v260
  %v262 = vpop.f32.mrf.mxu0
  %v263 = vadd.f32 %v166, %v262
  %264 = vmatprep.mubr.f32.mxu0 0.0
  %265 = vmatmul.mubr.f32.gmra.mxu0 %v180
  %v266 = vpop.f32.mrf.mxu0
  %v267 = vadd.f32 %v171, %v266
  %v268 = vpop.f32.mrf.mxu0
  %v269 = vadd.f32 %v171, %v268
  %270 = vdwg.mxu0
  %v271 = vtanh.pop %v249
  %v272 = vtanh.pop %v251
  %v273 = vtanh.pop %v255
  %v274 = vtanh.pop %v257
  %v275 = vtanh.pop %v261
  %v276 = vtanh.pop %v263
  %v277 = vtanh.pop %v267
  %v278 = vtanh.pop %v269
  %280 = vset.pattern.permute.xlu0 0
  %281 = vperm.xlu0 %280, %v21
  %v282 = vpop.permute.xlu0 %281
  %285 = vset.pattern.permute.xlu0 0
  %286 = vperm.xlu0 %285, %v22
  %v287 = vpop.permute.xlu0 %286
  %290 = vset.pattern.permute.xlu0 0
  %291 = vperm.xlu0 %290, %v23
  %v292 = vpop.permute.xlu0 %291
  %295 = vset.pattern.permute.xlu0 0
  %296 = vperm.xlu0 %295, %v24
  %v297 = vpop.permute.xlu0 %296
  %v299 = vmul.f32 %v271, %v282
  %v300 = vmul.f32 %v272, %v282
  %v301 = vmul.f32 %v273, %v287
  %v302 = vmul.f32 %v274, %v287
  %v303 = vmul.f32 %v275, %v292
  %v304 = vmul.f32 %v276, %v292
  %v305 = vmul.f32 %v277, %v297
  %v306 = vmul.f32 %v278, %v297
  %v307 = vadd.f32 %v299, %v301
  %v308 = vadd.f32 %v307, %v303
  %v309 = vadd.f32 %v308, %v305
  %v310 = vrot.slane %v309, 4
  %v311 = vadd.f32 %v309, %v310
  %v312 = vrot.slane %v311, 2
  %v313 = vadd.f32 %v311, %v312
  %v314 = vrot.slane %v313, 1
  %v315 = vadd.f32 %v313, %v314
  %v316 = vadd.f32 %v300, %v302
  %v317 = vadd.f32 %v316, %v304
  %v318 = vadd.f32 %v317, %v306
  %v319 = vrot.slane %v318, 4
  %v320 = vadd.f32 %v318, %v319
  %v321 = vrot.slane %v320, 2
  %v322 = vadd.f32 %v320, %v321
  %v323 = vrot.slane %v322, 1
  %v324 = vadd.f32 %v322, %v323
  %325 = vset.pattern.permute.xlu0 32
  %326 = vperm.xlu0 %325, %v21
  %v327 = vpop.permute.xlu0 %326
  %v329 = vadd.f32 %v315, %v327
  %v330 = vadd.f32 %v324, %v327
  %v331 = vxor.u32 %v329, 2147483648
  %v332 = vxor.u32 %v330, 2147483648
  %v333 = vmul.f32 %v331, 1.442695
  %v334 = vpow.pop %v333
  %v335 = vmul.f32 %v332, 1.442695
  %v336 = vpow.pop %v335
  %v337 = vadd.f32 %v334, 1.0
  %v338 = vadd.f32 %v336, 1.0
  %v339 = vrcp.pop %v337
  %v340 = vmul.f32 1.0, %v339
  %v341 = vrcp.pop %v338
  %v342 = vmul.f32 1.0, %v341
  %v345 = vcombine.low %v340, %v342
  %v347 = vunpack.c.l.s4 1966171168
  %v348 = vunpack.c.0.s8 %v347
  %v349 = vlaneseq
  %v350 = vshrl.u32 %v349, 7
  %v351 = vsub.s32 %v348, %v350
  %v352 = vrot.slane %v345, %v351
  %v354 = vunpack.c.l.s4 1966171168
  %v355 = vunpack.c.0.s8 %v354
  %v356 = vlaneseq
  %v357 = vshrl.u32 %v356, 7
  %v358 = vsub.s32 %v355, %v357
  %v359 = vrot.slane %v352, %v358
  %v361 = vlaneseq
  %vm362 = vcmp.ge.s32.totalorder %v361, 0
  %vm363 = vcmp.lt.s32.totalorder %v361, 256
  %vm364 = vmand %vm362, %vm363
  %365 = vst.msk [vmem:[%s2] sm:$0x3] %vm364, %v359
  // Predicated region
  $region10: #{coeff_nn_forward.1} parent=0 // pred_check
    _
  $region11: #{coeff_nn_forward.1} parent=0 // pred_check_branch
    %367 = sbr.rel (0) target = $region13
  $region12: #{coeff_nn_forward.1} parent=0 // pred_region
    _
  $region13: #{coeff_nn_forward.1} parent=0 // pred_fallthru
    _
  // Predicated region
  $region14: #{coeff_nn_forward.1} parent=0 // pred_check
    _
  $region15: #{coeff_nn_forward.1} parent=0 // pred_check_branch
    %369 = sbr.rel (0) target = $region17
  $region16: #{coeff_nn_forward.1} parent=0 // pred_region
    _
  $region17: #{coeff_nn_forward.1} parent=0 // pred_fallthru
    _

</llo_original>
